<compile_context>
chip_gen: v7x
topology: tpu7x:2x2x1
jax: 0.10.0
libtpu: 0.0.40
codegen_flags: <defaults>
</compile_context>

<pallas_src>
import jax
import jax.numpy as jnp
from jax import lax
from jax.experimental import pallas as pl
from jax.experimental.pallas import tpu as pltpu


def _conv_block1_kernel(x_ref, w1_ref, b1_ref, w2_ref, b2_ref, o_ref, ypad_ref):
    """One batch image per grid step.

    x_ref:    (Hp, Wp*Cin)           bf16, zero-padded input rows (lane-dense)
    w1_ref:   (3, Wp*Cin, Wp*Cmid)   bf16 banded weights, BN1 scale folded in
    b1_ref:   (1, Wp*Cmid)           f32 folded bias, zero at pad columns
    w2_ref:   (3, Wp*Cmid, Wp*Cout)  bf16 banded weights, BN2 scale folded in
    b2_ref:   (1, Wp*Cout)           f32 folded bias, zero at pad columns
    o_ref:    (H, Wp*Cout)           f32 output (pad cols stripped in wrapper)
    ypad_ref: (Hp, Wp*Cmid)          bf16 scratch for the intermediate y1
    """
    H = o_ref.shape[0]
    Hp, WpCmid = ypad_ref.shape
    f32 = jnp.float32

    # Only the top/bottom halo rows of the intermediate need to be zero; the
    # interior rows are fully overwritten below and y1's pad *columns* are
    # exactly zero by construction (zero blocks in the banded weights + zeroed
    # bias + ReLU).  Done unconditionally every step (2 tiny row stores) so it
    # stays correct when the "parallel" grid is sharded across TensorCores.
    zero_row = jnp.zeros((1, WpCmid), ypad_ref.dtype)
    ypad_ref[0:1, :] = zero_row
    ypad_ref[Hp - 1:Hp, :] = zero_row

    # ---- stage 1: conv1 (3x3, pad=1) + BN1 + ReLU ----
    # Each kernel row kh is one banded MXU matmul on a row-shifted slab.
    acc = jnp.dot(x_ref[0:H, :], w1_ref[0], preferred_element_type=f32)
    acc = acc + jnp.dot(x_ref[1:H + 1, :], w1_ref[1], preferred_element_type=f32)
    acc = acc + jnp.dot(x_ref[2:H + 2, :], w1_ref[2], preferred_element_type=f32)
    y1 = jnp.maximum(acc + b1_ref[...], 0.0)
    # One contiguous lane-dense store of the whole intermediate slab (bf16).
    ypad_ref[1:H + 1, :] = y1.astype(ypad_ref.dtype)

    # ---- stage 2: conv2 (3x3, pad=1) + BN2 + ReLU ----
    acc2 = jnp.dot(ypad_ref[0:H, :], w2_ref[0], preferred_element_type=f32)
    acc2 = acc2 + jnp.dot(ypad_ref[1:H + 1, :], w2_ref[1], preferred_element_type=f32)
    acc2 = acc2 + jnp.dot(ypad_ref[2:H + 2, :], w2_ref[2], preferred_element_type=f32)
    # One contiguous lane-dense output store.
    o_ref[...] = jnp.maximum(acc2 + b2_ref[...], 0.0).astype(o_ref.dtype)


@jax.jit
def conv_block1_forward(x_nchw,
                        w1_hwio, b1_conv, bn1_g, bn1_b, bn1_m, bn1_v,
                        w2_hwio, b2_conv, bn2_g, bn2_b, bn2_m, bn2_v):
    """Forward of conv_block1.  x_nchw: (N, Cin, H, W) -> (N, Cout, H, W)."""
    eps = 1e-5
    N, Cin, H, W = x_nchw.shape
    Cmid = w1_hwio.shape[-1]
    Cout = w2_hwio.shape[-1]
    Hp, Wp = H + 2, W + 2

    # Fold inference-mode BN into the conv weights / biases.
    s1 = bn1_g / jnp.sqrt(bn1_v + eps)
    s2 = bn2_g / jnp.sqrt(bn2_v + eps)
    w1f = w1_hwio * s1                      # (3, 3, Cin,  Cmid) f32
    w2f = w2_hwio * s2                      # (3, 3, Cmid, Cout) f32
    bb1 = (b1_conv - bn1_m) * s1 + bn1_b    # (Cmid,)
    bb2 = (b2_conv - bn2_m) * s2 + bn2_b    # (Cout,)

    # Indicator of "real" (non-pad) padded-column positions.
    jp = jnp.arange(Wp)
    interior = ((jp >= 1) & (jp <= W)).astype(jnp.float32)        # (Wp,)

    def banded(wf, Ci, Co):
        """Bake the 3x3 weights into 3 block-banded (Wp*Ci, Wp*Co) matrices.

        M[kh, j*Ci+ci, p*Co+co] = w[kh, kw=j-p+1, ci, co]  if |j-p|<=1 and
        1<=p<=W, else 0 — so one matmul per kh computes all kw taps for every
        output column, and the pad output columns come out exactly zero.
        """
        j = jnp.arange(Wp)
        kw = jnp.arange(3)
        ind = (j[None, :, None] == (jp[None, None, :] - 1 + kw[:, None, None]))
        ind = ind & (jp[None, None, :] >= 1) & (jp[None, None, :] <= W)
        M = jnp.einsum('wjp,hwio->hjipo', ind.astype(wf.dtype), wf)
        return M.reshape(3, Wp * Ci, Wp * Co).astype(jnp.bfloat16)

    w1b = banded(w1f, Cin, Cmid)            # (3, Wp*Cin,  Wp*Cmid) bf16
    w2b = banded(w2f, Cmid, Cout)           # (3, Wp*Cmid, Wp*Cout) bf16
    b1t = (interior[:, None] * bb1[None, :]).reshape(1, Wp * Cmid).astype(jnp.float32)
    b2t = (interior[:, None] * bb2[None, :]).reshape(1, Wp * Cout).astype(jnp.float32)

    # NCHW -> NHWC, zero-pad H/W by 1 and flatten (Wp, Cin) onto the lane axis.
    x = jnp.transpose(x_nchw, (0, 2, 3, 1)).astype(jnp.bfloat16)
    x = jnp.pad(x, ((0, 0), (1, 1), (1, 1), (0, 0)))
    x = x.reshape(N, Hp, Wp * Cin)

    out = pl.pallas_call(
        _conv_block1_kernel,
        out_shape=jax.ShapeDtypeStruct((N, H, Wp * Cout), jnp.float32),
        grid_spec=pltpu.PrefetchScalarGridSpec(
            num_scalar_prefetch=0,
            grid=(N,),
            in_specs=[
                pl.BlockSpec((None, Hp, Wp * Cin), lambda n: (n, 0, 0)),
                pl.BlockSpec((3, Wp * Cin, Wp * Cmid), lambda n: (0, 0, 0)),
                pl.BlockSpec((1, Wp * Cmid), lambda n: (0, 0)),
                pl.BlockSpec((3, Wp * Cmid, Wp * Cout), lambda n: (0, 0, 0)),
                pl.BlockSpec((1, Wp * Cout), lambda n: (0, 0)),
            ],
            out_specs=pl.BlockSpec((None, H, Wp * Cout), lambda n: (n, 0, 0)),
            scratch_shapes=[
                pltpu.VMEM((Hp, Wp * Cmid), jnp.bfloat16),
            ]),
        compiler_params=pltpu.CompilerParams(
            dimension_semantics=("parallel",),
            vmem_limit_bytes=32 * 1024 * 1024),
    )(x, w1b, b1t, w2b, b2t)

    # Strip the pad columns and go back to NCHW (cheap XLA layout plumbing).
    out = out.reshape(N, H, Wp, Cout)[:, :, 1:W + 1, :]
    return jnp.transpose(out, (0, 3, 1, 2))


def _reference(x_nchw,
               w1_hwio, b1_conv, bn1_g, bn1_b, bn1_m, bn1_v,
               w2_hwio, b2_conv, bn2_g, bn2_b, bn2_m, bn2_v):
    """Pure-JAX reference with matching bf16 operand rounding / f32 accumulation."""
    eps = 1e-5
    s1 = bn1_g / jnp.sqrt(bn1_v + eps)
    s2 = bn2_g / jnp.sqrt(bn2_v + eps)
    w1f = (w1_hwio * s1).astype(jnp.bfloat16)
    w2f = (w2_hwio * s2).astype(jnp.bfloat16)
    bb1 = (b1_conv - bn1_m) * s1 + bn1_b
    bb2 = (b2_conv - bn2_m) * s2 + bn2_b

    x = jnp.transpose(x_nchw, (0, 2, 3, 1)).astype(jnp.bfloat16)
    y = lax.conv_general_dilated(
        x, w1f, window_strides=(1, 1), padding=((1, 1), (1, 1)),
        dimension_numbers=("NHWC", "HWIO", "NHWC"),
        preferred_element_type=jnp.float32)
    y = jnp.maximum(y + bb1, 0.0).astype(jnp.bfloat16)
    y = lax.conv_general_dilated(
        y, w2f, window_strides=(1, 1), padding=((1, 1), (1, 1)),
        dimension_numbers=("NHWC", "HWIO", "NHWC"),
        preferred_element_type=jnp.float32)
    y = jnp.maximum(y + bb2, 0.0)
    return jnp.transpose(y, (0, 3, 1, 2))


if __name__ == "__main__":
    # Small shapes consistent with the module: in_ch=2 -> first conv sees 4
    # channels, out_ch=8, batch=2, 16x16 spatial.
    N, in_ch, out_ch, H, W = 2, 2, 8, 16, 16
    Cin = in_ch * 2

    key = jax.random.PRNGKey(0)
    ks = jax.random.split(key, 13)

    x = jax.random.normal(ks[0], (N, Cin, H, W), jnp.float32)

    # Deterministic synthetic parameters (weights generated directly in HWIO).
    w1 = jax.random.normal(ks[1], (3, 3, Cin, out_ch), jnp.float32) * 0.1
    b1 = jax.random.normal(ks[2], (out_ch,), jnp.float32) * 0.1
    g1 = 1.0 + 0.1 * jax.random.normal(ks[3], (out_ch,), jnp.float32)
    be1 = 0.1 * jax.random.normal(ks[4], (out_ch,), jnp.float32)
    # TODO(synk): PyTorch BatchNorm2d in train() mode uses batch statistics;
    # here we implement inference-mode BN with deterministic running stats.
    m1 = 0.05 * jax.random.normal(ks[5], (out_ch,), jnp.float32)
    v1 = 1.0 + 0.1 * jnp.abs(jax.random.normal(ks[6], (out_ch,), jnp.float32))

    w2 = jax.random.normal(ks[7], (3, 3, out_ch, out_ch), jnp.float32) * 0.1
    b2 = jax.random.normal(ks[8], (out_ch,), jnp.float32) * 0.1
    g2 = 1.0 + 0.1 * jax.random.normal(ks[9], (out_ch,), jnp.float32)
    be2 = 0.1 * jax.random.normal(ks[10], (out_ch,), jnp.float32)
    m2 = 0.05 * jax.random.normal(ks[11], (out_ch,), jnp.float32)
    v2 = 1.0 + 0.1 * jnp.abs(jax.random.normal(ks[12], (out_ch,), jnp.float32))

    out = conv_block1_forward(x, w1, b1, g1, be1, m1, v1,
                              w2, b2, g2, be2, m2, v2)
    out = jax.block_until_ready(out)

    ref = _reference(x, w1, b1, g1, be1, m1, v1,
                     w2, b2, g2, be2, m2, v2)

    assert out.shape == (N, out_ch, H, W), out.shape
    max_err = float(jnp.max(jnp.abs(out - ref)))
    # bf16 matmul operands -> slightly looser tolerance than a pure-f32 path.
    assert jnp.allclose(out, ref, atol=1e-2, rtol=1e-2), max_err

    print("KERNEL_OK")
</pallas_src>

<mosaic_0001>
module attributes {stable_mosaic.version = 11 : i64} {
  func.func @_conv_block1_kernel(%arg0: i32, %arg1: memref<1x18x72xbf16, #tpu.memory_space<vmem>>, %arg2: memref<3x72x144xbf16, #tpu.memory_space<vmem>>, %arg3: memref<1x144xf32, #tpu.memory_space<vmem>>, %arg4: memref<3x144x144xbf16, #tpu.memory_space<vmem>>, %arg5: memref<1x144xf32, #tpu.memory_space<vmem>>, %arg6: memref<1x16x144xf32, #tpu.memory_space<vmem>>, %arg7: memref<18x144xbf16, #tpu.memory_space<vmem>>) attributes {dimension_semantics = [#tpu.dimension_semantics<parallel>], iteration_bounds = array<i64: 2>, scalar_prefetch = 0 : i64, scratch_operands = 1 : i64, tpu.core_type = #tpu.core_type<tc>, window_params = [{transform_indices = @transform_0, window_bounds = array<i64: 1, 18, 72>}, {pipeline_mode = #tpu.pipeline_mode<synchronous>, transform_indices = @transform_1, window_bounds = array<i64: 3, 72, 144>}, {pipeline_mode = #tpu.pipeline_mode<synchronous>, transform_indices = @transform_2, window_bounds = array<i64: 1, 144>}, {pipeline_mode = #tpu.pipeline_mode<synchronous>, transform_indices = @transform_3, window_bounds = array<i64: 3, 144, 144>}, {pipeline_mode = #tpu.pipeline_mode<synchronous>, transform_indices = @transform_4, window_bounds = array<i64: 1, 144>}, {transform_indices = @transform_5, window_bounds = array<i64: 1, 16, 144>}]} {
    %cst = arith.constant 0.000000e+00 : bf16
    %0 = vector.broadcast %cst : bf16 to vector<1x144xbf16>
    %c0 = arith.constant 0 : index
    %c0_0 = arith.constant 0 : index
    %1 = vector.load %arg7[%c0, %c0_0] : memref<18x144xbf16, #tpu.memory_space<vmem>>, vector<1x144xbf16>
    tpu.vector_store %arg7[%c0, %c0_0], %0 {strides = array<i32>} : memref<18x144xbf16, #tpu.memory_space<vmem>>, vector<1x144xbf16>,
    %c17 = arith.constant 17 : index
    %c0_1 = arith.constant 0 : index
    %2 = vector.load %arg7[%c17, %c0_1] : memref<18x144xbf16, #tpu.memory_space<vmem>>, vector<1x144xbf16>
    tpu.vector_store %arg7[%c17, %c0_1], %0 {strides = array<i32>} : memref<18x144xbf16, #tpu.memory_space<vmem>>, vector<1x144xbf16>,
    %c0_2 = arith.constant 0 : index
    %c0_3 = arith.constant 0 : index
    %c0_4 = arith.constant 0 : index
    %3 = vector.load %arg1[%c0_2, %c0_3, %c0_4] : memref<1x18x72xbf16, #tpu.memory_space<vmem>>, vector<1x16x72xbf16>
    %4 = vector.shape_cast %3 : vector<1x16x72xbf16> to vector<16x72xbf16>
    %c0_5 = arith.constant 0 : index
    %c0_6 = arith.constant 0 : index
    %c0_7 = arith.constant 0 : index
    %5 = vector.load %arg2[%c0_5, %c0_6, %c0_7] : memref<3x72x144xbf16, #tpu.memory_space<vmem>>, vector<1x72x144xbf16>
    %6 = vector.shape_cast %5 : vector<1x72x144xbf16> to vector<72x144xbf16>
    %cst_8 = arith.constant dense<0.000000e+00> : vector<16x144xf32>
    %7 = tpu.matmul %4, %6, %cst_8 {dimension_numbers = #tpu.dot_dimension_numbers<[1], [0], [0], [1], [0, 0, 1, 1], [], []>} : vector<16x72xbf16>, vector<72x144xbf16>, vector<16x144xf32> -> vector<16x144xf32>
    %c0_9 = arith.constant 0 : index
    %c1 = arith.constant 1 : index
    %c0_10 = arith.constant 0 : index
    %8 = vector.load %arg1[%c0_9, %c1, %c0_10] : memref<1x18x72xbf16, #tpu.memory_space<vmem>>, vector<1x16x72xbf16>
    %9 = vector.shape_cast %8 : vector<1x16x72xbf16> to vector<16x72xbf16>
    %c1_11 = arith.constant 1 : index
    %c0_12 = arith.constant 0 : index
    %c0_13 = arith.constant 0 : index
    %10 = vector.load %arg2[%c1_11, %c0_12, %c0_13] : memref<3x72x144xbf16, #tpu.memory_space<vmem>>, vector<1x72x144xbf16>
    %11 = vector.shape_cast %10 : vector<1x72x144xbf16> to vector<72x144xbf16>
    %cst_14 = arith.constant dense<0.000000e+00> : vector<16x144xf32>
    %12 = tpu.matmul %9, %11, %cst_14 {dimension_numbers = #tpu.dot_dimension_numbers<[1], [0], [0], [1], [0, 0, 1, 1], [], []>} : vector<16x72xbf16>, vector<72x144xbf16>, vector<16x144xf32> -> vector<16x144xf32>
    %13 = arith.addf %7, %12 : vector<16x144xf32>
    %c0_15 = arith.constant 0 : index
    %c2 = arith.constant 2 : index
    %c0_16 = arith.constant 0 : index
    %14 = vector.load %arg1[%c0_15, %c2, %c0_16] : memref<1x18x72xbf16, #tpu.memory_space<vmem>>, vector<1x16x72xbf16>
    %15 = vector.shape_cast %14 : vector<1x16x72xbf16> to vector<16x72xbf16>
    %c2_17 = arith.constant 2 : index
    %c0_18 = arith.constant 0 : index
    %c0_19 = arith.constant 0 : index
    %16 = vector.load %arg2[%c2_17, %c0_18, %c0_19] : memref<3x72x144xbf16, #tpu.memory_space<vmem>>, vector<1x72x144xbf16>
    %17 = vector.shape_cast %16 : vector<1x72x144xbf16> to vector<72x144xbf16>
    %cst_20 = arith.constant dense<0.000000e+00> : vector<16x144xf32>
    %18 = tpu.matmul %15, %17, %cst_20 {dimension_numbers = #tpu.dot_dimension_numbers<[1], [0], [0], [1], [0, 0, 1, 1], [], []>} : vector<16x72xbf16>, vector<72x144xbf16>, vector<16x144xf32> -> vector<16x144xf32>
    %19 = arith.addf %13, %18 : vector<16x144xf32>
    %c0_21 = arith.constant 0 : index
    %c0_22 = arith.constant 0 : index
    %20 = vector.load %arg3[%c0_21, %c0_22] : memref<1x144xf32, #tpu.memory_space<vmem>>, vector<1x144xf32>
    %21 = vector.broadcast %20 : vector<1x144xf32> to vector<16x144xf32>
    %22 = arith.addf %19, %21 : vector<16x144xf32>
    %cst_23 = arith.constant 0.000000e+00 : f32
    %23 = vector.broadcast %cst_23 : f32 to vector<16x144xf32>
    %24 = arith.maximumf %22, %23 : vector<16x144xf32>
    %25 = arith.truncf %24 : vector<16x144xf32> to vector<16x144xbf16>
    %c1_24 = arith.constant 1 : index
    %c0_25 = arith.constant 0 : index
    %26 = vector.load %arg7[%c1_24, %c0_25] : memref<18x144xbf16, #tpu.memory_space<vmem>>, vector<16x144xbf16>
    tpu.vector_store %arg7[%c1_24, %c0_25], %25 {strides = array<i32>} : memref<18x144xbf16, #tpu.memory_space<vmem>>, vector<16x144xbf16>,
    %c0_26 = arith.constant 0 : index
    %c0_27 = arith.constant 0 : index
    %27 = vector.load %arg7[%c0_26, %c0_27] : memref<18x144xbf16, #tpu.memory_space<vmem>>, vector<16x144xbf16>
    %c0_28 = arith.constant 0 : index
    %c0_29 = arith.constant 0 : index
    %c0_30 = arith.constant 0 : index
    %28 = vector.load %arg4[%c0_28, %c0_29, %c0_30] : memref<3x144x144xbf16, #tpu.memory_space<vmem>>, vector<1x144x144xbf16>
    %29 = vector.shape_cast %28 : vector<1x144x144xbf16> to vector<144x144xbf16>
    %cst_31 = arith.constant dense<0.000000e+00> : vector<16x144xf32>
    %30 = tpu.matmul %27, %29, %cst_31 {dimension_numbers = #tpu.dot_dimension_numbers<[1], [0], [0], [1], [0, 0, 1, 1], [], []>} : vector<16x144xbf16>, vector<144x144xbf16>, vector<16x144xf32> -> vector<16x144xf32>
    %c1_32 = arith.constant 1 : index
    %c0_33 = arith.constant 0 : index
    %31 = vector.load %arg7[%c1_32, %c0_33] : memref<18x144xbf16, #tpu.memory_space<vmem>>, vector<16x144xbf16>
    %c1_34 = arith.constant 1 : index
    %c0_35 = arith.constant 0 : index
    %c0_36 = arith.constant 0 : index
    %32 = vector.load %arg4[%c1_34, %c0_35, %c0_36] : memref<3x144x144xbf16, #tpu.memory_space<vmem>>, vector<1x144x144xbf16>
    %33 = vector.shape_cast %32 : vector<1x144x144xbf16> to vector<144x144xbf16>
    %cst_37 = arith.constant dense<0.000000e+00> : vector<16x144xf32>
    %34 = tpu.matmul %31, %33, %cst_37 {dimension_numbers = #tpu.dot_dimension_numbers<[1], [0], [0], [1], [0, 0, 1, 1], [], []>} : vector<16x144xbf16>, vector<144x144xbf16>, vector<16x144xf32> -> vector<16x144xf32>
    %35 = arith.addf %30, %34 : vector<16x144xf32>
    %c2_38 = arith.constant 2 : index
    %c0_39 = arith.constant 0 : index
    %36 = vector.load %arg7[%c2_38, %c0_39] : memref<18x144xbf16, #tpu.memory_space<vmem>>, vector<16x144xbf16>
    %c2_40 = arith.constant 2 : index
    %c0_41 = arith.constant 0 : index
    %c0_42 = arith.constant 0 : index
    %37 = vector.load %arg4[%c2_40, %c0_41, %c0_42] : memref<3x144x144xbf16, #tpu.memory_space<vmem>>, vector<1x144x144xbf16>
    %38 = vector.shape_cast %37 : vector<1x144x144xbf16> to vector<144x144xbf16>
    %cst_43 = arith.constant dense<0.000000e+00> : vector<16x144xf32>
    %39 = tpu.matmul %36, %38, %cst_43 {dimension_numbers = #tpu.dot_dimension_numbers<[1], [0], [0], [1], [0, 0, 1, 1], [], []>} : vector<16x144xbf16>, vector<144x144xbf16>, vector<16x144xf32> -> vector<16x144xf32>
    %40 = arith.addf %35, %39 : vector<16x144xf32>
    %c0_44 = arith.constant 0 : index
    %c0_45 = arith.constant 0 : index
    %41 = vector.load %arg5[%c0_44, %c0_45] : memref<1x144xf32, #tpu.memory_space<vmem>>, vector<1x144xf32>
    %42 = vector.broadcast %41 : vector<1x144xf32> to vector<16x144xf32>
    %43 = arith.addf %40, %42 : vector<16x144xf32>
    %cst_46 = arith.constant 0.000000e+00 : f32
    %44 = vector.broadcast %cst_46 : f32 to vector<16x144xf32>
    %45 = arith.maximumf %43, %44 : vector<16x144xf32>
    %c0_47 = arith.constant 0 : index
    %c0_48 = arith.constant 0 : index
    %c0_49 = arith.constant 0 : index
    %46 = vector.load %arg6[%c0_47, %c0_48, %c0_49] : memref<1x16x144xf32, #tpu.memory_space<vmem>>, vector<1x16x144xf32>
    %47 = vector.shape_cast %46 : vector<1x16x144xf32> to vector<16x144xf32>
    %48 = vector.shape_cast %45 : vector<16x144xf32> to vector<1x16x144xf32>
    tpu.vector_store %arg6[%c0_47, %c0_48, %c0_49], %48 {strides = array<i32>} : memref<1x16x144xf32, #tpu.memory_space<vmem>>, vector<1x16x144xf32>,
    return
  }
  func.func @transform_0(%arg0: i32) -> (i32, i32, i32) {
    %c0_i32 = arith.constant 0 : i32
    %c0_i32_0 = arith.constant 0 : i32
    %c0_i32_1 = arith.constant 0 : i32
    return %arg0, %c0_i32, %c0_i32_0 : i32, i32, i32
  }
  func.func @transform_1(%arg0: i32) -> (i32, i32, i32) {
    %c0_i32 = arith.constant 0 : i32
    %c0_i32_0 = arith.constant 0 : i32
    %c0_i32_1 = arith.constant 0 : i32
    %c0_i32_2 = arith.constant 0 : i32
    return %c0_i32, %c0_i32_0, %c0_i32_1 : i32, i32, i32
  }
  func.func @transform_2(%arg0: i32) -> (i32, i32) {
    %c0_i32 = arith.constant 0 : i32
    %c0_i32_0 = arith.constant 0 : i32
    %c0_i32_1 = arith.constant 0 : i32
    return %c0_i32, %c0_i32_0 : i32, i32
  }
  func.func @transform_3(%arg0: i32) -> (i32, i32, i32) {
    %c0_i32 = arith.constant 0 : i32
    %c0_i32_0 = arith.constant 0 : i32
    %c0_i32_1 = arith.constant 0 : i32
    %c0_i32_2 = arith.constant 0 : i32
    return %c0_i32, %c0_i32_0, %c0_i32_1 : i32, i32, i32
  }
  func.func @transform_4(%arg0: i32) -> (i32, i32) {
    %c0_i32 = arith.constant 0 : i32
    %c0_i32_0 = arith.constant 0 : i32
    %c0_i32_1 = arith.constant 0 : i32
    return %c0_i32, %c0_i32_0 : i32, i32
  }
  func.func @transform_5(%arg0: i32) -> (i32, i32, i32) {
    %c0_i32 = arith.constant 0 : i32
    %c0_i32_0 = arith.constant 0 : i32
    %c0_i32_1 = arith.constant 0 : i32
    return %arg0, %c0_i32, %c0_i32_0 : i32, i32, i32
  }
}

</mosaic_0001>

<llo_original>
// kernel: conv_block1_forward.1
$region0: #{conv_block1_forward.1}
  #allocation0 [shape = 'u32[]', space=smem, size = 0x4, offset = 0x4, fixed_abs, tag = 'smem constant byte address 0x4 - core index']
  #allocation1 [shape = 'u32[144,128]{1,0:T(1,128)}', space=vmem, size = 0x12000, scoped, tag = 'internal scratch']
  #allocation2 [shape = 'bf16[18,144]{1,0:T(8,128)(2,1)}', space=vmem, size = 0x3000, scoped, tag = 'scratch operand']
  %s0 = inlined_call_operand.vmem [shape: bf16[2,18,72], index: 0, kind: input, shape index: {}]
  %s1 = inlined_call_operand.vmem [shape: bf16[3,72,144], index: 1, kind: input, shape index: {}]
  %s2 = inlined_call_operand.vmem [shape: f32[1,144], index: 2, kind: input, shape index: {}]
  %s3 = inlined_call_operand.vmem [shape: bf16[3,144,144], index: 3, kind: input, shape index: {}]
  %s4 = inlined_call_operand.vmem [shape: f32[1,144], index: 4, kind: input, shape index: {}]
  %s5 = inlined_call_operand.vmem [shape: f32[2,16,144], index: 5, kind: output, shape index: {}]
  %s6 = sld [smem:[#allocation0]]
  $region53: #{conv_block1_forward.1} parent=0
    _
  %s8 = ssub.s32 1, %s6
  %s9 = scalar_select 0, %s8, %s6
  loop: start=0, step=1, limit=4
  $region2: #{conv_block1_forward.1} parent=0 // loop_pre_header
    _
  $region3: #{conv_block1_forward.1} parent=0 // loop_header
    %s11 = sphi 0, %s15
    %p12 = scmp.ge.s32.totalorder %s11, 4
    %s21 = sphi 0, %s23
    %s24 = sphi 0, %s21
    %s25 = sphi 0, %s24
    %s41 = sphi 0, %s25
    %s45 = sphi 0, %s45
    %s47 = sphi 0, %s45
    %s48 = sphi 0, %s47
    %s62 = sphi 0, %s48
    %s66 = sphi 0, %s66
    %s68 = sphi 0, %s66
    %s69 = sphi 0, %s68
    %s83 = sphi 0, %s69
    %s87 = sphi 0, %s87
    %s89 = sphi 0, %s87
    %s90 = sphi 0, %s89
    %s104 = sphi 0, %s90
    %s108 = sphi 0, %s108
    %s110 = sphi 0, %s108
    %s111 = sphi 0, %s110
    %s125 = sphi 0, %s111
    %s131 = sphi 0, %s133
    %s134 = sphi 0, %s131
    %s135 = sphi 0, %s134
    %s151 = sphi 0, %s135
  $region4: #{conv_block1_forward.1} parent=0 // loop_header_branch
    %14 = sbr.rel (%p12) target = $region8
  $region5: #{conv_block1_forward.1} parent=0 // loop_body
    %s16 = ssub.s32 %s11, 1
    %s17 = ssub.s32 %s11, 2
    %s18 = sadd.s32 %s11, 1
    %s19 = ssub.s32 %s11, %s18
    %p20 = scmp.eq.s32.totalorder %s19, 0
    %s22 = sadd.s32 %s21, 1
    %s23 = scalar_select %p20, %s21, %s22
    %p26 = pneg %p20
    %p27 = scmp.eq.s32.totalorder %s11, 1
    %p28 = por %p26, %p27
    %p29 = scmp.ne.s32.totalorder %s21, %s24
    %p30 = scmp.eq.s32.totalorder %s11, 0
    %p31 = por %p29, %p30
    %p32 = scmp.ne.s32.totalorder %s21, %s24
    %p33 = scmp.eq.s32.totalorder %s16, 1
    %p34 = por %p32, %p33
    %p35 = scmp.ne.s32.totalorder %s24, %s25
    %p36 = scmp.eq.s32.totalorder %s16, 0
    %p37 = por %p35, %p36
    %p38 = scmp.ne.s32.totalorder %s24, %s25
    %p39 = scmp.eq.s32.totalorder %s17, 1
    %p40 = por %p38, %p39
    %p42 = scmp.ne.s32.totalorder %s25, %s41
    %p43 = scmp.eq.s32.totalorder %s17, 0
    %p44 = por %p42, %p43
    %s46 = sadd.s32 %s45, 1
    %p49 = scmp.eq.s32.totalorder %s11, 1
    %p50 = scmp.ne.s32.totalorder %s45, %s47
    %p51 = scmp.eq.s32.totalorder %s11, 0
    %p52 = por %p50, %p51
    %p53 = scmp.ne.s32.totalorder %s45, %s47
    %p54 = scmp.eq.s32.totalorder %s16, 1
    %p55 = por %p53, %p54
    %p56 = scmp.ne.s32.totalorder %s47, %s48
    %p57 = scmp.eq.s32.totalorder %s16, 0
    %p58 = por %p56, %p57
    %p59 = scmp.ne.s32.totalorder %s47, %s48
    %p60 = scmp.eq.s32.totalorder %s17, 1
    %p61 = por %p59, %p60
    %p63 = scmp.ne.s32.totalorder %s48, %s62
    %p64 = scmp.eq.s32.totalorder %s17, 0
    %p65 = por %p63, %p64
    %s67 = sadd.s32 %s66, 1
    %p70 = scmp.eq.s32.totalorder %s11, 1
    %p71 = scmp.ne.s32.totalorder %s66, %s68
    %p72 = scmp.eq.s32.totalorder %s11, 0
    %p73 = por %p71, %p72
    %p74 = scmp.ne.s32.totalorder %s66, %s68
    %p75 = scmp.eq.s32.totalorder %s16, 1
    %p76 = por %p74, %p75
    %p77 = scmp.ne.s32.totalorder %s68, %s69
    %p78 = scmp.eq.s32.totalorder %s16, 0
    %p79 = por %p77, %p78
    %p80 = scmp.ne.s32.totalorder %s68, %s69
    %p81 = scmp.eq.s32.totalorder %s17, 1
    %p82 = por %p80, %p81
    %p84 = scmp.ne.s32.totalorder %s69, %s83
    %p85 = scmp.eq.s32.totalorder %s17, 0
    %p86 = por %p84, %p85
    %s88 = sadd.s32 %s87, 1
    %p91 = scmp.eq.s32.totalorder %s11, 1
    %p92 = scmp.ne.s32.totalorder %s87, %s89
    %p93 = scmp.eq.s32.totalorder %s11, 0
    %p94 = por %p92, %p93
    %p95 = scmp.ne.s32.totalorder %s87, %s89
    %p96 = scmp.eq.s32.totalorder %s16, 1
    %p97 = por %p95, %p96
    %p98 = scmp.ne.s32.totalorder %s89, %s90
    %p99 = scmp.eq.s32.totalorder %s16, 0
    %p100 = por %p98, %p99
    %p101 = scmp.ne.s32.totalorder %s89, %s90
    %p102 = scmp.eq.s32.totalorder %s17, 1
    %p103 = por %p101, %p102
    %p105 = scmp.ne.s32.totalorder %s90, %s104
    %p106 = scmp.eq.s32.totalorder %s17, 0
    %p107 = por %p105, %p106
    %s109 = sadd.s32 %s108, 1
    %p112 = scmp.eq.s32.totalorder %s11, 1
    %p113 = scmp.ne.s32.totalorder %s108, %s110
    %p114 = scmp.eq.s32.totalorder %s11, 0
    %p115 = por %p113, %p114
    %p116 = scmp.ne.s32.totalorder %s108, %s110
    %p117 = scmp.eq.s32.totalorder %s16, 1
    %p118 = por %p116, %p117
    %p119 = scmp.ne.s32.totalorder %s110, %s111
    %p120 = scmp.eq.s32.totalorder %s16, 0
    %p121 = por %p119, %p120
    %p122 = scmp.ne.s32.totalorder %s110, %s111
    %p123 = scmp.eq.s32.totalorder %s17, 1
    %p124 = por %p122, %p123
    %p126 = scmp.ne.s32.totalorder %s111, %s125
    %p127 = scmp.eq.s32.totalorder %s17, 0
    %p128 = por %p126, %p127
    %s129 = ssub.s32 %s11, %s18
    %p130 = scmp.eq.s32.totalorder %s129, 0
    %s132 = sadd.s32 %s131, 1
    %s133 = scalar_select %p130, %s131, %s132
    %p136 = pneg %p130
    %p137 = scmp.eq.s32.totalorder %s11, 1
    %p138 = por %p136, %p137
    %p139 = scmp.ne.s32.totalorder %s131, %s134
    %p140 = scmp.eq.s32.totalorder %s11, 0
    %p141 = por %p139, %p140
    %p142 = scmp.ne.s32.totalorder %s131, %s134
    %p143 = scmp.eq.s32.totalorder %s16, 1
    %p144 = por %p142, %p143
    %p145 = scmp.ne.s32.totalorder %s134, %s135
    %p146 = scmp.eq.s32.totalorder %s16, 0
    %p147 = por %p145, %p146
    %p148 = scmp.ne.s32.totalorder %s134, %s135
    %p149 = scmp.eq.s32.totalorder %s17, 1
    %p150 = por %p148, %p149
    %p152 = scmp.ne.s32.totalorder %s135, %s151
    %p153 = scmp.eq.s32.totalorder %s17, 0
    %p154 = por %p152, %p153
    %p155 = scmp.le.s32.totalorder 1, %s11
    %p156 = scmp.lt.s32.totalorder %s11, 3
    %p157 = pnand %p155, %p156
    %p158 = pneg %p157
    // Predicated region
    $region9: #{conv_block1_forward.1} parent=5 // pred_check
      _
    $region10: #{conv_block1_forward.1} parent=5 // pred_check_branch
      %160 = sbr.rel (%p157) target = $region12
    $region11: #{conv_block1_forward.1} parent=5 // pred_region
      %s161 = ssub.s32 %s11, 1
      // Predicated region
      $region13: #{conv_block1_forward.1} parent=11 // pred_check
        %p162 = pneg %p58
      $region14: #{conv_block1_forward.1} parent=11 // pred_check_branch
        %164 = sbr.rel (%p162) target = $region16
      $region15: #{conv_block1_forward.1} parent=11 // pred_region
        _
      $region16: #{conv_block1_forward.1} parent=11 // pred_fallthru
        _
      // Predicated region
      $region17: #{conv_block1_forward.1} parent=11 // pred_check
        %p165 = pneg %p79
      $region18: #{conv_block1_forward.1} parent=11 // pred_check_branch
        %167 = sbr.rel (%p165) target = $region20
      $region19: #{conv_block1_forward.1} parent=11 // pred_region
        _
      $region20: #{conv_block1_forward.1} parent=11 // pred_fallthru
        _
      // Predicated region
      $region21: #{conv_block1_forward.1} parent=11 // pred_check
        %p168 = pneg %p100
      $region22: #{conv_block1_forward.1} parent=11 // pred_check_branch
        %170 = sbr.rel (%p168) target = $region24
      $region23: #{conv_block1_forward.1} parent=11 // pred_region
        _
      $region24: #{conv_block1_forward.1} parent=11 // pred_fallthru
        _
      // Predicated region
      $region25: #{conv_block1_forward.1} parent=11 // pred_check
        %p171 = pneg %p121
      $region26: #{conv_block1_forward.1} parent=11 // pred_check_branch
        %173 = sbr.rel (%p171) target = $region28
      $region27: #{conv_block1_forward.1} parent=11 // pred_region
        _
      $region28: #{conv_block1_forward.1} parent=11 // pred_fallthru
        _
    $region12: #{conv_block1_forward.1} parent=5 // pred_fallthru
      _
    %p174 = scmp.lt.s32.totalorder %s11, 2
    // Predicated region
    $region29: #{conv_block1_forward.1} parent=5 // pred_check
      %p175 = pneg %p174
    $region30: #{conv_block1_forward.1} parent=5 // pred_check_branch
      %177 = sbr.rel (%p175) target = $region32
    $region31: #{conv_block1_forward.1} parent=5 // pred_region
      // Predicated region
      $region33: #{conv_block1_forward.1} parent=31 // pred_check
        %p178 = pneg %p31
      $region34: #{conv_block1_forward.1} parent=31 // pred_check_branch
        %180 = sbr.rel (%p178) target = $region36
      $region35: #{conv_block1_forward.1} parent=31 // pred_region
        %p181 = scmp.lt.s32.totalorder %s11, 1
        %s182 = scalar_select %p181, %s11, 1
        %s183 = smul.addr %s182, 3
        %s184 = smul.addr %s183, 4
        %s185 = scalar_lea.vmem %s0, %s184
      $region36: #{conv_block1_forward.1} parent=31 // pred_fallthru
        _
    $region32: #{conv_block1_forward.1} parent=5 // pred_fallthru
      _
    %p186 = scmp.le.s32.totalorder 1, %s11
    %p187 = scmp.lt.s32.totalorder %s11, 3
    %p188 = pnand %p186, %p187
    %p189 = pneg %p188
    // Predicated region
    $region37: #{conv_block1_forward.1} parent=5 // pred_check
      _
    $region38: #{conv_block1_forward.1} parent=5 // pred_check_branch
      %191 = sbr.rel (%p188) target = $region40
    $region39: #{conv_block1_forward.1} parent=5 // pred_region
      %s192 = ssub.s32 %s11, 1
      %p193 = scmp.lt.s32.totalorder %s16, 1
      %s194 = scalar_select %p193, %s16, 1
      %s195 = smul.addr %s194, 3
      %s196 = smul.addr %s195, 4
      %s197 = scalar_lea.vmem %s0, %s196
      %p198 = pneg %p37
      %p199 = pneg %p34
      %p200 = pneg %p58
      %p201 = pneg %p55
      %p202 = pneg %p79
      %p203 = pneg %p76
      %p204 = pneg %p100
      %p205 = pneg %p97
      %p206 = pneg %p121
      %p207 = pneg %p118
      %p208 = pneg %p147
      %p209 = pneg %p144
      %p210 = scmp.lt.s32.totalorder %s16, 1
      %s211 = scalar_select %p210, %s16, 1
      %s212 = smul.addr %s211, 4
      %s213 = smul.addr %s212, 8
      %s214 = scalar_lea.vmem %s5, %s213
      %p215 = scmp.lt.s32.totalorder %s16, 1
      %s216 = scalar_select %p215, %s16, 1
      %s217 = smul.addr %s216, 3
      %s218 = smul.addr %s217, 4
      %s219 = scalar_lea.vmem %s0, %s218
      %p220 = scmp.lt.s32.totalorder %s16, 1
      %s221 = scalar_select %p220, %s16, 1
      %s222 = smul.addr %s221, 4
      %s223 = smul.addr %s222, 8
      %s224 = scalar_lea.vmem %s5, %s223
      %vm226 = vcmask 1040384
      %vm227 = vsmask.f32 256
      %vm228 = vmand %vm226, %vm227
      %vm229 = vcmask 126980
      %vm230 = vsmask.f32 4352
      %vm231 = vmand %vm229, %vm230
      %vm232 = vmor %vm231, %vm228
      %v233 = vld [vmem:[#allocation2] sm:$0x11]
      %v234 = vsel %vm232, 0, %v233
      %235 = vst [vmem:[#allocation2] sm:$0x11] %v234
      %vm236 = vsmask.f32 7938
      %vm237 = vmand %vm226, %vm236
      %vm238 = vsmask.f32 7954
      %vm239 = vmand %vm229, %vm238
      %vm240 = vmor %vm239, %vm237
      %v241 = vld [vmem:[#allocation2 + $0x10] sm:$0x11]
      %v242 = vsel %vm240, 0, %v241
      %243 = vst [vmem:[#allocation2 + $0x10] sm:$0x11] %v242
      %v244 = vld [vmem:[%s219] sm:$0xf]
      %v245 = vld [vmem:[%s219 + $0x4] sm:$0xf]
      %v246 = vld [vmem:[%s1] sm:$0xff]
      %v247 = vld [vmem:[%s1 + $0x8] sm:$0xff]
      %v248 = vld [vmem:[%s1 + $0x10] sm:$0xff]
      %v249 = vld [vmem:[%s1 + $0x18] sm:$0xff]
      %v250 = vld [vmem:[%s1 + $0x20] sm:$0xff]
      %v251 = vld [vmem:[%s1 + $0x28] sm:$0xff]
      %v252 = vld [vmem:[%s1 + $0x30] sm:$0xff]
      %v253 = vld [vmem:[%s1 + $0x38] sm:$0xff]
      %v254 = vld [vmem:[%s1 + $0x40] sm:$0xff]
      %v255 = vld [vmem:[%s219 + $0x8] sm:$0x1]
      %s256 = scalar_lea.vmem %s1, 72
      %v257 = vld [vmem:[%s256] sm:$0xff]
      %v258 = vld [vmem:[%s256 + $0x8] sm:$0xff]
      %v259 = vld [vmem:[%s256 + $0x10] sm:$0xff]
      %v260 = vld [vmem:[%s256 + $0x18] sm:$0xff]
      %v261 = vld [vmem:[%s256 + $0x20] sm:$0xff]
      %v262 = vld [vmem:[%s256 + $0x28] sm:$0xff]
      %v263 = vld [vmem:[%s256 + $0x30] sm:$0xff]
      %v264 = vld [vmem:[%s256 + $0x38] sm:$0xff]
      %v265 = vld [vmem:[%s256 + $0x40] sm:$0xff]
      %v269 = vunpack.c.l.b16 %v244
      %v270 = vunpack.c.l.b16 %v245
      %v271 = vunpack.c.l.b16 %v255
      %v272 = vpack.c.b16 %v270, %v269
      %v273 = vpack.c.b16 %v271, %v271
      %vm274 = vsmask.f32 7424
      %v276 = vshrl.u32 %v272, 16
      %v278 = vshll.u32 %v272, 16
      %v280 = vrot.slane %v278, 1
      %v281 = vor.u32 %v276, %v280
      %v283 = vshll.u32 %v273, 16
      %v285 = vrot.slane %v283, 1
      %v286 = vsel %vm274, %v281, %v285
      %v296 = vunpack.c.l.b16 %v257
      %v297 = vunpack.c.h.b16 %v257
      %v298 = vunpack.c.l.b16 %v258
      %v299 = vunpack.c.h.b16 %v258
      %v300 = vunpack.c.l.b16 %v259
      %v301 = vunpack.c.h.b16 %v259
      %v302 = vunpack.c.l.b16 %v260
      %v303 = vunpack.c.h.b16 %v260
      %v304 = vunpack.c.l.b16 %v261
      %v305 = vunpack.c.h.b16 %v261
      %v306 = vunpack.c.l.b16 %v262
      %v307 = vunpack.c.h.b16 %v262
      %v308 = vunpack.c.l.b16 %v263
      %v309 = vunpack.c.h.b16 %v263
      %v310 = vunpack.c.l.b16 %v264
      %v311 = vunpack.c.h.b16 %v264
      %v312 = vunpack.c.l.b16 %v265
      %v313 = vunpack.c.h.b16 %v265
      %v314 = vpack.c.b16 %v298, %v296
      %v315 = vpack.c.b16 %v299, %v297
      %v316 = vpack.c.b16 %v302, %v300
      %v317 = vpack.c.b16 %v303, %v301
      %v318 = vpack.c.b16 %v306, %v304
      %v319 = vpack.c.b16 %v307, %v305
      %v320 = vpack.c.b16 %v310, %v308
      %v321 = vpack.c.b16 %v311, %v309
      %v322 = vpack.c.b16 %v312, %v312
      %v323 = vpack.c.b16 %v313, %v313
      %vm332 = vcmask 588800
      %v334 = vsel %vm332, %v286, 0
      %vm336 = vcmask 1043456
      %v338 = vsel %vm336, %v322, 0
      %v341 = vsel %vm336, %v323, 0
      %343 = vmatprep.subr.bf16.mxu0 %v315
      %344 = vmatpush1.bf16.msra.mxu0 %v314
      %345 = vmatprep.subr.bf16.mxu0 %v317
      %346 = vmatpush1.bf16.msra.mxu0 %v316
      %347 = vmatprep.subr.bf16.mxu0 %v319
      %348 = vmatpush1.bf16.msra.mxu0 %v318
      %349 = vmatprep.subr.bf16.mxu0 %v321
      %350 = vmatpush1.bf16.msra.mxu0 %v320
      %351 = vmatprep.subr.bf16.mxu0 %v341
      %352 = vmatpush1.bf16.msra.mxu0 %v338
      %353 = vmatprep.subr.bf16.mxu0 0
      %354 = vmatpush1.bf16.msra.mxu0 0
      %355 = vmatprep.subr.bf16.mxu0 0
      %356 = vmatpush1.bf16.msra.mxu0 0
      %357 = vmatprep.subr.bf16.mxu0 0
      %358 = vmatpush1.bf16.msra.mxu0 0
      %359 = vmatprep.subr.bf16.mxu0 0
      %360 = vmatpush1.bf16.msra.mxu0 0
      %361 = vmatprep.subr.bf16.mxu0 0
      %362 = vmatpush1.bf16.msra.mxu0 0
      %363 = vmatprep.subr.bf16.mxu0 0
      %364 = vmatpush1.bf16.msra.mxu0 0
      %365 = vmatprep.subr.bf16.mxu0 0
      %366 = vmatpush1.bf16.msra.mxu0 0
      %367 = vmatprep.subr.bf16.mxu0 0
      %368 = vmatpush1.bf16.msra.mxu0 0
      %369 = vmatprep.subr.bf16.mxu0 0
      %370 = vmatpush1.bf16.msra.mxu0 0
      %371 = vmatprep.subr.bf16.mxu0 0
      %372 = vmatpush1.bf16.msra.mxu0 0
      %373 = vmatprep.subr.bf16.mxu0 0
      %374 = vmatpush1.bf16.msra.mxu0 0
      %375 = vmatprep.mubr.bf16.mxu0 0
      %376 = vmatmul.mubr.bf16.gmra.mrb[0].mxu0 %v334
      %v377 = vpop.f32.mrb[0].mxu0
      %v378 = vadd.f32 0.0, %v377
      %v379 = vpop.f32.mrb[0].mxu0
      %v380 = vadd.f32 0.0, %v379
      %v381 = vpop.f32.mrb[0].mxu0
      %v382 = vadd.f32 0.0, %v381
      %v383 = vpop.f32.mrb[0].mxu0
      %v384 = vadd.f32 0.0, %v383
      %385 = vdwg.mxu0
      %v395 = vunpack.c.l.b16 %v246
      %v396 = vunpack.c.h.b16 %v246
      %v397 = vunpack.c.l.b16 %v247
      %v398 = vunpack.c.h.b16 %v247
      %v399 = vunpack.c.l.b16 %v248
      %v400 = vunpack.c.h.b16 %v248
      %v401 = vunpack.c.l.b16 %v249
      %v402 = vunpack.c.h.b16 %v249
      %v403 = vunpack.c.l.b16 %v250
      %v404 = vunpack.c.h.b16 %v250
      %v405 = vunpack.c.l.b16 %v251
      %v406 = vunpack.c.h.b16 %v251
      %v407 = vunpack.c.l.b16 %v252
      %v408 = vunpack.c.h.b16 %v252
      %v409 = vunpack.c.l.b16 %v253
      %v410 = vunpack.c.h.b16 %v253
      %v411 = vunpack.c.l.b16 %v254
      %v412 = vunpack.c.h.b16 %v254
      %v413 = vpack.c.b16 %v397, %v395
      %v414 = vpack.c.b16 %v398, %v396
      %v415 = vpack.c.b16 %v401, %v399
      %v416 = vpack.c.b16 %v402, %v400
      %v417 = vpack.c.b16 %v405, %v403
      %v418 = vpack.c.b16 %v406, %v404
      %v419 = vpack.c.b16 %v409, %v407
      %v420 = vpack.c.b16 %v410, %v408
      %v421 = vpack.c.b16 %v411, %v411
      %v422 = vpack.c.b16 %v412, %v412
      %v431 = vsel %vm332, %v272, 0
      %v434 = vsel %vm336, %v421, 0
      %v437 = vsel %vm336, %v422, 0
      %439 = vmatprep.subr.bf16.mxu0 %v414
      %440 = vmatpush1.bf16.msra.mxu0 %v413
      %441 = vmatprep.subr.bf16.mxu0 %v416
      %442 = vmatpush1.bf16.msra.mxu0 %v415
      %443 = vmatprep.subr.bf16.mxu0 %v418
      %444 = vmatpush1.bf16.msra.mxu0 %v417
      %445 = vmatprep.subr.bf16.mxu0 %v420
      %446 = vmatpush1.bf16.msra.mxu0 %v419
      %447 = vmatprep.subr.bf16.mxu0 %v437
      %448 = vmatpush1.bf16.msra.mxu0 %v434
      %449 = vmatprep.subr.bf16.mxu0 0
      %450 = vmatpush1.bf16.msra.mxu0 0
      %451 = vmatprep.subr.bf16.mxu0 0
      %452 = vmatpush1.bf16.msra.mxu0 0
      %453 = vmatprep.subr.bf16.mxu0 0
      %454 = vmatpush1.bf16.msra.mxu0 0
      %455 = vmatprep.subr.bf16.mxu0 0
      %456 = vmatpush1.bf16.msra.mxu0 0
      %457 = vmatprep.subr.bf16.mxu0 0
      %458 = vmatpush1.bf16.msra.mxu0 0
      %459 = vmatprep.subr.bf16.mxu0 0
      %460 = vmatpush1.bf16.msra.mxu0 0
      %461 = vmatprep.subr.bf16.mxu0 0
      %462 = vmatpush1.bf16.msra.mxu0 0
      %463 = vmatprep.subr.bf16.mxu0 0
      %464 = vmatpush1.bf16.msra.mxu0 0
      %465 = vmatprep.subr.bf16.mxu0 0
      %466 = vmatpush1.bf16.msra.mxu0 0
      %467 = vmatprep.subr.bf16.mxu0 0
      %468 = vmatpush1.bf16.msra.mxu0 0
      %469 = vmatprep.subr.bf16.mxu0 0
      %470 = vmatpush1.bf16.msra.mxu0 0
      %471 = vmatprep.mubr.bf16.mxu0 0
      %472 = vmatmul.mubr.bf16.gmra.mrb[0].mxu0 %v431
      %v473 = vpop.f32.mrb[0].mxu0
      %v474 = vadd.f32 %v378, %v473
      %v475 = vpop.f32.mrb[0].mxu0
      %v476 = vadd.f32 %v380, %v475
      %v477 = vpop.f32.mrb[0].mxu0
      %v478 = vadd.f32 %v382, %v477
      %v479 = vpop.f32.mrb[0].mxu0
      %v480 = vadd.f32 %v384, %v479
      %481 = vdwg.mxu0
      %v482 = vld [vmem:[%s219] sm:$0xe]
      %s483 = scalar_lea.vmem %s1, 144
      %v484 = vld [vmem:[%s483] sm:$0xff]
      %v485 = vld [vmem:[%s483 + $0x8] sm:$0xff]
      %v486 = vld [vmem:[%s483 + $0x10] sm:$0xff]
      %v487 = vld [vmem:[%s483 + $0x18] sm:$0xff]
      %v488 = vld [vmem:[%s483 + $0x20] sm:$0xff]
      %v489 = vld [vmem:[%s483 + $0x28] sm:$0xff]
      %v490 = vld [vmem:[%s483 + $0x30] sm:$0xff]
      %v491 = vld [vmem:[%s483 + $0x38] sm:$0xff]
      %v492 = vld [vmem:[%s483 + $0x40] sm:$0xff]
      %v494 = vunpack.c.l.b16 %v482
      %v495 = vpack.c.b16 %v270, %v494
      %vm496 = vcmask 1046528
      %v497 = vrot.slane %v495, 1
      %v498 = vrot.slane %v273, 1
      %v499 = vsel %vm496, %v497, %v498
      %v509 = vunpack.c.l.b16 %v484
      %v510 = vunpack.c.h.b16 %v484
      %v511 = vunpack.c.l.b16 %v485
      %v512 = vunpack.c.h.b16 %v485
      %v513 = vunpack.c.l.b16 %v486
      %v514 = vunpack.c.h.b16 %v486
      %v515 = vunpack.c.l.b16 %v487
      %v516 = vunpack.c.h.b16 %v487
      %v517 = vunpack.c.l.b16 %v488
      %v518 = vunpack.c.h.b16 %v488
      %v519 = vunpack.c.l.b16 %v489
      %v520 = vunpack.c.h.b16 %v489
      %v521 = vunpack.c.l.b16 %v490
      %v522 = vunpack.c.h.b16 %v490
      %v523 = vunpack.c.l.b16 %v491
      %v524 = vunpack.c.h.b16 %v491
      %v525 = vunpack.c.l.b16 %v492
      %v526 = vunpack.c.h.b16 %v492
      %v527 = vpack.c.b16 %v511, %v509
      %v528 = vpack.c.b16 %v512, %v510
      %v529 = vpack.c.b16 %v515, %v513
      %v530 = vpack.c.b16 %v516, %v514
      %v531 = vpack.c.b16 %v519, %v517
      %v532 = vpack.c.b16 %v520, %v518
      %v533 = vpack.c.b16 %v523, %v521
      %v534 = vpack.c.b16 %v524, %v522
      %v535 = vpack.c.b16 %v525, %v525
      %v536 = vpack.c.b16 %v526, %v526
      %v546 = vsel %vm332, %v499, 0
      %v549 = vsel %vm336, %v535, 0
      %v552 = vsel %vm336, %v536, 0
      %554 = vmatprep.subr.bf16.mxu0 %v528
      %555 = vmatpush1.bf16.msra.mxu0 %v527
      %556 = vmatprep.subr.bf16.mxu0 %v530
      %557 = vmatpush1.bf16.msra.mxu0 %v529
      %558 = vmatprep.subr.bf16.mxu0 %v532
      %559 = vmatpush1.bf16.msra.mxu0 %v531
      %560 = vmatprep.subr.bf16.mxu0 %v534
      %561 = vmatpush1.bf16.msra.mxu0 %v533
      %562 = vmatprep.subr.bf16.mxu0 %v552
      %563 = vmatpush1.bf16.msra.mxu0 %v549
      %564 = vmatprep.subr.bf16.mxu0 0
      %565 = vmatpush1.bf16.msra.mxu0 0
      %566 = vmatprep.subr.bf16.mxu0 0
      %567 = vmatpush1.bf16.msra.mxu0 0
      %568 = vmatprep.subr.bf16.mxu0 0
      %569 = vmatpush1.bf16.msra.mxu0 0
      %570 = vmatprep.subr.bf16.mxu0 0
      %571 = vmatpush1.bf16.msra.mxu0 0
      %572 = vmatprep.subr.bf16.mxu0 0
      %573 = vmatpush1.bf16.msra.mxu0 0
      %574 = vmatprep.subr.bf16.mxu0 0
      %575 = vmatpush1.bf16.msra.mxu0 0
      %576 = vmatprep.subr.bf16.mxu0 0
      %577 = vmatpush1.bf16.msra.mxu0 0
      %578 = vmatprep.subr.bf16.mxu0 0
      %579 = vmatpush1.bf16.msra.mxu0 0
      %580 = vmatprep.subr.bf16.mxu0 0
      %581 = vmatpush1.bf16.msra.mxu0 0
      %582 = vmatprep.subr.bf16.mxu0 0
      %583 = vmatpush1.bf16.msra.mxu0 0
      %584 = vmatprep.subr.bf16.mxu0 0
      %585 = vmatpush1.bf16.msra.mxu0 0
      %586 = vmatprep.mubr.bf16.mxu0 0
      %587 = vmatmul.mubr.bf16.gmra.mrb[0].mxu0 %v546
      %v588 = vpop.f32.mrb[0].mxu0
      %v589 = vadd.f32 0.0, %v588
      %v590 = vpop.f32.mrb[0].mxu0
      %v591 = vadd.f32 0.0, %v590
      %v592 = vpop.f32.mrb[0].mxu0
      %v593 = vadd.f32 0.0, %v592
      %v594 = vpop.f32.mrb[0].mxu0
      %v595 = vadd.f32 0.0, %v594
      %596 = vdwg.mxu0
      %v597 = vadd.f32 %v474, %v589
      %v598 = vadd.f32 %v476, %v591
      %v599 = vadd.f32 %v478, %v593
      %v600 = vadd.f32 %v480, %v595
      %v601 = vld [vmem:[%s2] sm:$0x3]
      %v603 = vlaneseq
      %v604 = vshrl.u32 %v603, 7
      %v605 = vsub.s32 0, %v604
      %v606 = vrot.slane %v601, %v605
      %v607 = vlaneseq
      %v608 = vshrl.u32 %v607, 7
      %v609 = vsub.s32 1, %v608
      %v610 = vrot.slane %v601, %v609
      %v613 = vadd.f32 %v597, %v606
      %v614 = vadd.f32 %v598, %v610
      %v615 = vadd.f32 %v599, %v606
      %v616 = vadd.f32 %v600, %v610
      %v617 = vmax.f32 %v613, 0.0
      %v618 = vmax.f32 %v614, 0.0
      %v619 = vmax.f32 %v615, 0.0
      %v620 = vmax.f32 %v616, 0.0
      %v621 = vpack.c.bf16 %v619, %v617
      %v622 = vpack.c.bf16 %v620, %v618
      %v625 = vunpack.c.l.b16 %v621
      %v626 = vunpack.c.l.b16 %v622
      %v627 = vunpack.c.h.b16 %v621
      %v628 = vunpack.c.h.b16 %v622
      %v629 = vpack.c.b16 %v626, %v625
      %v630 = vpack.c.b16 %v628, %v627
      %vm631 = vsmask.f32 4368
      %vm632 = vmor %vm227, %vm631
      %v634 = vshrl.u32 %v629, 16
      %v636 = vrot.slane %v634, 7
      %v637 = vshll.u32 %v629, 16
      %v639 = vor.u32 %v636, %v637
      %v640 = vrot.slane %v636, 4
      %v642 = vshrl.u32 %v630, 16
      %v644 = vrot.slane %v642, 7
      %v645 = vshll.u32 %v630, 16
      %v647 = vor.u32 %v644, %v645
      %v648 = vsel %vm632, %v640, %v647
      %v649 = vrot.slane %v644, 4
      %vm653 = vcmask 1043456
      %vm654 = vmand %vm653, %vm236
      %vm655 = vcmask 130052
      %vm656 = vmand %vm655, %vm238
      %vm657 = vmor %vm656, %vm654
      %v658 = vld [vmem:[#allocation2] sm:$0xff]
      %v659 = vsel %vm657, %v639, %v658
      %660 = vst [vmem:[#allocation2] sm:$0xff] %v659
      %vm661 = vcmask 130052
      %vm662 = vmor %vm661, %vm336
      %663 = vst.msk [vmem:[#allocation2 + $0x8] sm:$0xff] %vm662, %v648
      %v664 = vld [vmem:[#allocation2 + $0x10] sm:$0x11]
      %v665 = vsel %vm232, %v649, %v664
      %666 = vst [vmem:[#allocation2 + $0x10] sm:$0x11] %v665
      %v667 = vld [vmem:[#allocation2] sm:$0xff]
      %v668 = vld [vmem:[#allocation2 + $0x8] sm:$0xff]
      %v669 = vld [vmem:[%s3] sm:$0xff]
      %v670 = vld [vmem:[%s3 + $0x8] sm:$0xff]
      %v671 = vld [vmem:[%s3 + $0x10] sm:$0xff]
      %v672 = vld [vmem:[%s3 + $0x18] sm:$0xff]
      %v673 = vld [vmem:[%s3 + $0x20] sm:$0xff]
      %v674 = vld [vmem:[%s3 + $0x28] sm:$0xff]
      %v675 = vld [vmem:[%s3 + $0x30] sm:$0xff]
      %v676 = vld [vmem:[%s3 + $0x38] sm:$0xff]
      %v677 = vld [vmem:[%s3 + $0x40] sm:$0xff]
      %v678 = vld [vmem:[%s3 + $0x48] sm:$0xff]
      %v679 = vld [vmem:[%s3 + $0x50] sm:$0xff]
      %v680 = vld [vmem:[%s3 + $0x58] sm:$0xff]
      %v681 = vld [vmem:[%s3 + $0x60] sm:$0xff]
      %v682 = vld [vmem:[%s3 + $0x68] sm:$0xff]
      %v683 = vld [vmem:[%s3 + $0x70] sm:$0xff]
      %v684 = vld [vmem:[%s3 + $0x78] sm:$0xff]
      %v685 = vld [vmem:[%s3 + $0x80] sm:$0xff]
      %v686 = vld [vmem:[%s3 + $0x88] sm:$0xff]
      %v687 = vld [vmem:[#allocation2 + $0x10] sm:$0x11]
      %s688 = scalar_lea.vmem %s3, 144
      %v689 = vld [vmem:[%s688] sm:$0xff]
      %v690 = vld [vmem:[%s688 + $0x8] sm:$0xff]
      %v691 = vld [vmem:[%s688 + $0x10] sm:$0xff]
      %v692 = vld [vmem:[%s688 + $0x18] sm:$0xff]
      %v693 = vld [vmem:[%s688 + $0x20] sm:$0xff]
      %v694 = vld [vmem:[%s688 + $0x28] sm:$0xff]
      %v695 = vld [vmem:[%s688 + $0x30] sm:$0xff]
      %v696 = vld [vmem:[%s688 + $0x38] sm:$0xff]
      %v697 = vld [vmem:[%s688 + $0x40] sm:$0xff]
      %v698 = vld [vmem:[%s688 + $0x48] sm:$0xff]
      %v699 = vld [vmem:[%s688 + $0x50] sm:$0xff]
      %v700 = vld [vmem:[%s688 + $0x58] sm:$0xff]
      %v701 = vld [vmem:[%s688 + $0x60] sm:$0xff]
      %v702 = vld [vmem:[%s688 + $0x68] sm:$0xff]
      %v703 = vld [vmem:[%s688 + $0x70] sm:$0xff]
      %v704 = vld [vmem:[%s688 + $0x78] sm:$0xff]
      %v705 = vld [vmem:[%s688 + $0x80] sm:$0xff]
      %v706 = vld [vmem:[%s688 + $0x88] sm:$0xff]
      %v710 = vunpack.c.l.b16 %v667
      %v711 = vunpack.c.h.b16 %v667
      %v712 = vunpack.c.l.b16 %v668
      %v713 = vunpack.c.h.b16 %v668
      %v714 = vunpack.c.l.b16 %v687
      %v715 = vunpack.c.h.b16 %v687
      %v716 = vpack.c.b16 %v712, %v710
      %v717 = vpack.c.b16 %v713, %v711
      %v718 = vpack.c.b16 %v714, %v714
      %v719 = vpack.c.b16 %v715, %v715
      %v721 = vshrl.u32 %v716, 16
      %v723 = vshll.u32 %v716, 16
      %v725 = vrot.slane %v723, 1
      %v726 = vor.u32 %v721, %v725
      %v728 = vshll.u32 %v718, 16
      %v730 = vrot.slane %v728, 1
      %v731 = vsel %vm274, %v726, %v730
      %v733 = vshrl.u32 %v717, 16
      %v735 = vshll.u32 %v717, 16
      %v737 = vrot.slane %v735, 1
      %v738 = vor.u32 %v733, %v737
      %v740 = vshll.u32 %v719, 16
      %v742 = vrot.slane %v740, 1
      %v743 = vsel %vm274, %v738, %v742
      %v763 = vunpack.c.l.b16 %v689
      %v764 = vunpack.c.h.b16 %v689
      %v765 = vunpack.c.l.b16 %v690
      %v766 = vunpack.c.h.b16 %v690
      %v767 = vunpack.c.l.b16 %v691
      %v768 = vunpack.c.h.b16 %v691
      %v769 = vunpack.c.l.b16 %v692
      %v770 = vunpack.c.h.b16 %v692
      %v771 = vunpack.c.l.b16 %v693
      %v772 = vunpack.c.h.b16 %v693
      %v773 = vunpack.c.l.b16 %v694
      %v774 = vunpack.c.h.b16 %v694
      %v775 = vunpack.c.l.b16 %v695
      %v776 = vunpack.c.h.b16 %v695
      %v777 = vunpack.c.l.b16 %v696
      %v778 = vunpack.c.h.b16 %v696
      %v779 = vunpack.c.l.b16 %v697
      %v780 = vunpack.c.h.b16 %v697
      %v781 = vunpack.c.l.b16 %v698
      %v782 = vunpack.c.h.b16 %v698
      %v783 = vunpack.c.l.b16 %v699
      %v784 = vunpack.c.h.b16 %v699
      %v785 = vunpack.c.l.b16 %v700
      %v786 = vunpack.c.h.b16 %v700
      %v787 = vunpack.c.l.b16 %v701
      %v788 = vunpack.c.h.b16 %v701
      %v789 = vunpack.c.l.b16 %v702
      %v790 = vunpack.c.h.b16 %v702
      %v791 = vunpack.c.l.b16 %v703
      %v792 = vunpack.c.h.b16 %v703
      %v793 = vunpack.c.l.b16 %v704
      %v794 = vunpack.c.h.b16 %v704
      %v795 = vunpack.c.l.b16 %v705
      %v796 = vunpack.c.h.b16 %v705
      %v797 = vunpack.c.l.b16 %v706
      %v798 = vunpack.c.h.b16 %v706
      %v799 = vpack.c.b16 %v765, %v763
      %v800 = vpack.c.b16 %v766, %v764
      %v801 = vpack.c.b16 %v769, %v767
      %v802 = vpack.c.b16 %v770, %v768
      %v803 = vpack.c.b16 %v773, %v771
      %v804 = vpack.c.b16 %v774, %v772
      %v805 = vpack.c.b16 %v777, %v775
      %v806 = vpack.c.b16 %v778, %v776
      %v807 = vpack.c.b16 %v781, %v779
      %v808 = vpack.c.b16 %v782, %v780
      %v809 = vpack.c.b16 %v785, %v783
      %v810 = vpack.c.b16 %v786, %v784
      %v811 = vpack.c.b16 %v789, %v787
      %v812 = vpack.c.b16 %v790, %v788
      %v813 = vpack.c.b16 %v793, %v791
      %v814 = vpack.c.b16 %v794, %v792
      %v815 = vpack.c.b16 %v797, %v795
      %v816 = vpack.c.b16 %v798, %v796
      %vm835 = vcmask 130048
      %v837 = vsel %vm835, %v743, 0
      %839 = vmatprep.subr.bf16.mxu0 %v800
      %840 = vmatpush1.bf16.msra.mxu0 %v799
      %841 = vmatprep.subr.bf16.mxu0 %v802
      %842 = vmatpush1.bf16.msra.mxu0 %v801
      %843 = vmatprep.subr.bf16.mxu0 %v804
      %844 = vmatpush1.bf16.msra.mxu0 %v803
      %845 = vmatprep.subr.bf16.mxu0 %v806
      %846 = vmatpush1.bf16.msra.mxu0 %v805
      %847 = vmatprep.subr.bf16.mxu0 %v808
      %848 = vmatpush1.bf16.msra.mxu0 %v807
      %849 = vmatprep.subr.bf16.mxu0 %v810
      %850 = vmatpush1.bf16.msra.mxu0 %v809
      %851 = vmatprep.subr.bf16.mxu0 %v812
      %852 = vmatpush1.bf16.msra.mxu0 %v811
      %853 = vmatprep.subr.bf16.mxu0 %v814
      %854 = vmatpush1.bf16.msra.mxu0 %v813
      %855 = vmatprep.subr.bf16.mxu0 %v816
      %856 = vmatpush1.bf16.msra.mxu0 %v815
      %857 = vmatprep.subr.bf16.mxu0 0
      %858 = vmatpush1.bf16.msra.mxu0 0
      %859 = vmatprep.subr.bf16.mxu0 0
      %860 = vmatpush1.bf16.msra.mxu0 0
      %861 = vmatprep.subr.bf16.mxu0 0
      %862 = vmatpush1.bf16.msra.mxu0 0
      %863 = vmatprep.subr.bf16.mxu0 0
      %864 = vmatpush1.bf16.msra.mxu0 0
      %865 = vmatprep.subr.bf16.mxu0 0
      %866 = vmatpush1.bf16.msra.mxu0 0
      %867 = vmatprep.subr.bf16.mxu0 0
      %868 = vmatpush1.bf16.msra.mxu0 0
      %869 = vmatprep.subr.bf16.mxu0 0
      %870 = vmatpush1.bf16.msra.mxu0 0
      %871 = vmatprep.mubr.bf16.mxu0 %v837
      %872 = vmatmul.mubr.bf16.gmra.mrb[0].mxu0 %v731
      %v873 = vpop.f32.mrb[0].mxu0
      %v874 = vadd.f32 0.0, %v873
      %v875 = vpop.f32.mrb[0].mxu0
      %v876 = vadd.f32 0.0, %v875
      %v877 = vpop.f32.mrb[0].mxu0
      %v878 = vadd.f32 0.0, %v877
      %v879 = vpop.f32.mrb[0].mxu0
      %v880 = vadd.f32 0.0, %v879
      %881 = vdwg.mxu0
      %v901 = vunpack.c.l.b16 %v669
      %v902 = vunpack.c.h.b16 %v669
      %v903 = vunpack.c.l.b16 %v670
      %v904 = vunpack.c.h.b16 %v670
      %v905 = vunpack.c.l.b16 %v671
      %v906 = vunpack.c.h.b16 %v671
      %v907 = vunpack.c.l.b16 %v672
      %v908 = vunpack.c.h.b16 %v672
      %v909 = vunpack.c.l.b16 %v673
      %v910 = vunpack.c.h.b16 %v673
      %v911 = vunpack.c.l.b16 %v674
      %v912 = vunpack.c.h.b16 %v674
      %v913 = vunpack.c.l.b16 %v675
      %v914 = vunpack.c.h.b16 %v675
      %v915 = vunpack.c.l.b16 %v676
      %v916 = vunpack.c.h.b16 %v676
      %v917 = vunpack.c.l.b16 %v677
      %v918 = vunpack.c.h.b16 %v677
      %v919 = vunpack.c.l.b16 %v678
      %v920 = vunpack.c.h.b16 %v678
      %v921 = vunpack.c.l.b16 %v679
      %v922 = vunpack.c.h.b16 %v679
      %v923 = vunpack.c.l.b16 %v680
      %v924 = vunpack.c.h.b16 %v680
      %v925 = vunpack.c.l.b16 %v681
      %v926 = vunpack.c.h.b16 %v681
      %v927 = vunpack.c.l.b16 %v682
      %v928 = vunpack.c.h.b16 %v682
      %v929 = vunpack.c.l.b16 %v683
      %v930 = vunpack.c.h.b16 %v683
      %v931 = vunpack.c.l.b16 %v684
      %v932 = vunpack.c.h.b16 %v684
      %v933 = vunpack.c.l.b16 %v685
      %v934 = vunpack.c.h.b16 %v685
      %v935 = vunpack.c.l.b16 %v686
      %v936 = vunpack.c.h.b16 %v686
      %v937 = vpack.c.b16 %v903, %v901
      %v938 = vpack.c.b16 %v904, %v902
      %v939 = vpack.c.b16 %v907, %v905
      %v940 = vpack.c.b16 %v908, %v906
      %v941 = vpack.c.b16 %v911, %v909
      %v942 = vpack.c.b16 %v912, %v910
      %v943 = vpack.c.b16 %v915, %v913
      %v944 = vpack.c.b16 %v916, %v914
      %v945 = vpack.c.b16 %v919, %v917
      %v946 = vpack.c.b16 %v920, %v918
      %v947 = vpack.c.b16 %v923, %v921
      %v948 = vpack.c.b16 %v924, %v922
      %v949 = vpack.c.b16 %v927, %v925
      %v950 = vpack.c.b16 %v928, %v926
      %v951 = vpack.c.b16 %v931, %v929
      %v952 = vpack.c.b16 %v932, %v930
      %v953 = vpack.c.b16 %v935, %v933
      %v954 = vpack.c.b16 %v936, %v934
      %v973 = vsel %vm835, %v717, 0
      %975 = vmatprep.subr.bf16.mxu0 %v938
      %976 = vmatpush1.bf16.msra.mxu0 %v937
      %977 = vmatprep.subr.bf16.mxu0 %v940
      %978 = vmatpush1.bf16.msra.mxu0 %v939
      %979 = vmatprep.subr.bf16.mxu0 %v942
      %980 = vmatpush1.bf16.msra.mxu0 %v941
      %981 = vmatprep.subr.bf16.mxu0 %v944
      %982 = vmatpush1.bf16.msra.mxu0 %v943
      %983 = vmatprep.subr.bf16.mxu0 %v946
      %984 = vmatpush1.bf16.msra.mxu0 %v945
      %985 = vmatprep.subr.bf16.mxu0 %v948
      %986 = vmatpush1.bf16.msra.mxu0 %v947
      %987 = vmatprep.subr.bf16.mxu0 %v950
      %988 = vmatpush1.bf16.msra.mxu0 %v949
      %989 = vmatprep.subr.bf16.mxu0 %v952
      %990 = vmatpush1.bf16.msra.mxu0 %v951
      %991 = vmatprep.subr.bf16.mxu0 %v954
      %992 = vmatpush1.bf16.msra.mxu0 %v953
      %993 = vmatprep.subr.bf16.mxu0 0
      %994 = vmatpush1.bf16.msra.mxu0 0
      %995 = vmatprep.subr.bf16.mxu0 0
      %996 = vmatpush1.bf16.msra.mxu0 0
      %997 = vmatprep.subr.bf16.mxu0 0
      %998 = vmatpush1.bf16.msra.mxu0 0
      %999 = vmatprep.subr.bf16.mxu0 0
      %1000 = vmatpush1.bf16.msra.mxu0 0
      %1001 = vmatprep.subr.bf16.mxu0 0
      %1002 = vmatpush1.bf16.msra.mxu0 0
      %1003 = vmatprep.subr.bf16.mxu0 0
      %1004 = vmatpush1.bf16.msra.mxu0 0
      %1005 = vmatprep.subr.bf16.mxu0 0
      %1006 = vmatpush1.bf16.msra.mxu0 0
      %1007 = vmatprep.mubr.bf16.mxu0 %v973
      %1008 = vmatmul.mubr.bf16.gmra.mrb[0].mxu0 %v716
      %v1009 = vpop.f32.mrb[0].mxu0
      %v1010 = vadd.f32 %v874, %v1009
      %v1011 = vpop.f32.mrb[0].mxu0
      %v1012 = vadd.f32 %v876, %v1011
      %v1013 = vpop.f32.mrb[0].mxu0
      %v1014 = vadd.f32 %v878, %v1013
      %v1015 = vpop.f32.mrb[0].mxu0
      %v1016 = vadd.f32 %v880, %v1015
      %1017 = vdwg.mxu0
      %v1018 = vld [vmem:[#allocation2] sm:$0xee]
      %s1019 = scalar_lea.vmem %s3, 288
      %v1020 = vld [vmem:[%s1019] sm:$0xff]
      %v1021 = vld [vmem:[%s1019 + $0x8] sm:$0xff]
      %v1022 = vld [vmem:[%s1019 + $0x10] sm:$0xff]
      %v1023 = vld [vmem:[%s1019 + $0x18] sm:$0xff]
      %v1024 = vld [vmem:[%s1019 + $0x20] sm:$0xff]
      %v1025 = vld [vmem:[%s1019 + $0x28] sm:$0xff]
      %v1026 = vld [vmem:[%s1019 + $0x30] sm:$0xff]
      %v1027 = vld [vmem:[%s1019 + $0x38] sm:$0xff]
      %v1028 = vld [vmem:[%s1019 + $0x40] sm:$0xff]
      %v1029 = vld [vmem:[%s1019 + $0x48] sm:$0xff]
      %v1030 = vld [vmem:[%s1019 + $0x50] sm:$0xff]
      %v1031 = vld [vmem:[%s1019 + $0x58] sm:$0xff]
      %v1032 = vld [vmem:[%s1019 + $0x60] sm:$0xff]
      %v1033 = vld [vmem:[%s1019 + $0x68] sm:$0xff]
      %v1034 = vld [vmem:[%s1019 + $0x70] sm:$0xff]
      %v1035 = vld [vmem:[%s1019 + $0x78] sm:$0xff]
      %v1036 = vld [vmem:[%s1019 + $0x80] sm:$0xff]
      %v1037 = vld [vmem:[%s1019 + $0x88] sm:$0xff]
      %v1039 = vunpack.c.l.b16 %v1018
      %v1040 = vunpack.c.h.b16 %v1018
      %v1041 = vpack.c.b16 %v712, %v1039
      %v1042 = vpack.c.b16 %v713, %v1040
      %v1043 = vrot.slane %v1041, 1
      %v1044 = vrot.slane %v718, 1
      %v1045 = vsel %vm496, %v1043, %v1044
      %v1046 = vrot.slane %v1042, 1
      %v1047 = vrot.slane %v719, 1
      %v1048 = vsel %vm496, %v1046, %v1047
      %v1068 = vunpack.c.l.b16 %v1020
      %v1069 = vunpack.c.h.b16 %v1020
      %v1070 = vunpack.c.l.b16 %v1021
      %v1071 = vunpack.c.h.b16 %v1021
      %v1072 = vunpack.c.l.b16 %v1022
      %v1073 = vunpack.c.h.b16 %v1022
      %v1074 = vunpack.c.l.b16 %v1023
      %v1075 = vunpack.c.h.b16 %v1023
      %v1076 = vunpack.c.l.b16 %v1024
      %v1077 = vunpack.c.h.b16 %v1024
      %v1078 = vunpack.c.l.b16 %v1025
      %v1079 = vunpack.c.h.b16 %v1025
      %v1080 = vunpack.c.l.b16 %v1026
      %v1081 = vunpack.c.h.b16 %v1026
      %v1082 = vunpack.c.l.b16 %v1027
      %v1083 = vunpack.c.h.b16 %v1027
      %v1084 = vunpack.c.l.b16 %v1028
      %v1085 = vunpack.c.h.b16 %v1028
      %v1086 = vunpack.c.l.b16 %v1029
      %v1087 = vunpack.c.h.b16 %v1029
      %v1088 = vunpack.c.l.b16 %v1030
      %v1089 = vunpack.c.h.b16 %v1030
      %v1090 = vunpack.c.l.b16 %v1031
      %v1091 = vunpack.c.h.b16 %v1031
      %v1092 = vunpack.c.l.b16 %v1032
      %v1093 = vunpack.c.h.b16 %v1032
      %v1094 = vunpack.c.l.b16 %v1033
      %v1095 = vunpack.c.h.b16 %v1033
      %v1096 = vunpack.c.l.b16 %v1034
      %v1097 = vunpack.c.h.b16 %v1034
      %v1098 = vunpack.c.l.b16 %v1035
      %v1099 = vunpack.c.h.b16 %v1035
      %v1100 = vunpack.c.l.b16 %v1036
      %v1101 = vunpack.c.h.b16 %v1036
      %v1102 = vunpack.c.l.b16 %v1037
      %v1103 = vunpack.c.h.b16 %v1037
      %v1104 = vpack.c.b16 %v1070, %v1068
      %v1105 = vpack.c.b16 %v1071, %v1069
      %v1106 = vpack.c.b16 %v1074, %v1072
      %v1107 = vpack.c.b16 %v1075, %v1073
      %v1108 = vpack.c.b16 %v1078, %v1076
      %v1109 = vpack.c.b16 %v1079, %v1077
      %v1110 = vpack.c.b16 %v1082, %v1080
      %v1111 = vpack.c.b16 %v1083, %v1081
      %v1112 = vpack.c.b16 %v1086, %v1084
      %v1113 = vpack.c.b16 %v1087, %v1085
      %v1114 = vpack.c.b16 %v1090, %v1088
      %v1115 = vpack.c.b16 %v1091, %v1089
      %v1116 = vpack.c.b16 %v1094, %v1092
      %v1117 = vpack.c.b16 %v1095, %v1093
      %v1118 = vpack.c.b16 %v1098, %v1096
      %v1119 = vpack.c.b16 %v1099, %v1097
      %v1120 = vpack.c.b16 %v1102, %v1100
      %v1121 = vpack.c.b16 %v1103, %v1101
      %v1141 = vsel %vm835, %v1048, 0
      %1143 = vmatprep.subr.bf16.mxu0 %v1105
      %1144 = vmatpush1.bf16.msra.mxu0 %v1104
      %1145 = vmatprep.subr.bf16.mxu0 %v1107
      %1146 = vmatpush1.bf16.msra.mxu0 %v1106
      %1147 = vmatprep.subr.bf16.mxu0 %v1109
      %1148 = vmatpush1.bf16.msra.mxu0 %v1108
      %1149 = vmatprep.subr.bf16.mxu0 %v1111
      %1150 = vmatpush1.bf16.msra.mxu0 %v1110
      %1151 = vmatprep.subr.bf16.mxu0 %v1113
      %1152 = vmatpush1.bf16.msra.mxu0 %v1112
      %1153 = vmatprep.subr.bf16.mxu0 %v1115
      %1154 = vmatpush1.bf16.msra.mxu0 %v1114
      %1155 = vmatprep.subr.bf16.mxu0 %v1117
      %1156 = vmatpush1.bf16.msra.mxu0 %v1116
      %1157 = vmatprep.subr.bf16.mxu0 %v1119
      %1158 = vmatpush1.bf16.msra.mxu0 %v1118
      %1159 = vmatprep.subr.bf16.mxu0 %v1121
      %1160 = vmatpush1.bf16.msra.mxu0 %v1120
      %1161 = vmatprep.subr.bf16.mxu0 0
      %1162 = vmatpush1.bf16.msra.mxu0 0
      %1163 = vmatprep.subr.bf16.mxu0 0
      %1164 = vmatpush1.bf16.msra.mxu0 0
      %1165 = vmatprep.subr.bf16.mxu0 0
      %1166 = vmatpush1.bf16.msra.mxu0 0
      %1167 = vmatprep.subr.bf16.mxu0 0
      %1168 = vmatpush1.bf16.msra.mxu0 0
      %1169 = vmatprep.subr.bf16.mxu0 0
      %1170 = vmatpush1.bf16.msra.mxu0 0
      %1171 = vmatprep.subr.bf16.mxu0 0
      %1172 = vmatpush1.bf16.msra.mxu0 0
      %1173 = vmatprep.subr.bf16.mxu0 0
      %1174 = vmatpush1.bf16.msra.mxu0 0
      %1175 = vmatprep.mubr.bf16.mxu0 %v1141
      %1176 = vmatmul.mubr.bf16.gmra.mrb[0].mxu0 %v1045
      %v1177 = vpop.f32.mrb[0].mxu0
      %v1178 = vadd.f32 0.0, %v1177
      %v1179 = vpop.f32.mrb[0].mxu0
      %v1180 = vadd.f32 0.0, %v1179
      %v1181 = vpop.f32.mrb[0].mxu0
      %v1182 = vadd.f32 0.0, %v1181
      %v1183 = vpop.f32.mrb[0].mxu0
      %v1184 = vadd.f32 0.0, %v1183
      %1185 = vdwg.mxu0
      %v1186 = vadd.f32 %v1010, %v1178
      %v1187 = vadd.f32 %v1012, %v1180
      %v1188 = vadd.f32 %v1014, %v1182
      %v1189 = vadd.f32 %v1016, %v1184
      %v1190 = vld [vmem:[%s4] sm:$0x3]
      %v1192 = vlaneseq
      %v1193 = vshrl.u32 %v1192, 7
      %v1194 = vsub.s32 0, %v1193
      %v1195 = vrot.slane %v1190, %v1194
      %v1196 = vlaneseq
      %v1197 = vshrl.u32 %v1196, 7
      %v1198 = vsub.s32 1, %v1197
      %v1199 = vrot.slane %v1190, %v1198
      %v1202 = vadd.f32 %v1186, %v1195
      %v1203 = vadd.f32 %v1187, %v1199
      %v1204 = vadd.f32 %v1188, %v1195
      %v1205 = vadd.f32 %v1189, %v1199
      %v1206 = vmax.f32 %v1202, 0.0
      %v1207 = vmax.f32 %v1203, 0.0
      %v1208 = vmax.f32 %v1204, 0.0
      %v1209 = vmax.f32 %v1205, 0.0
      %1210 = vst [vmem:[%s224] sm:$0xff] %v1206
      %1211 = vst.msk [vmem:[%s224 + $0x8] sm:$0xff] %vm835, %v1207
      %1212 = vst [vmem:[%s224 + $0x10] sm:$0xff] %v1208
      %1213 = vst.msk [vmem:[%s224 + $0x18] sm:$0xff] %vm835, %v1209
      %p1214 = scmp.lt.s32.totalorder %s16, 1
      %s1215 = scalar_select %p1214, %s16, 1
      %s1216 = smul.addr %s1215, 4
      %s1217 = smul.addr %s1216, 8
      %s1218 = scalar_lea.vmem %s5, %s1217
      // Predicated region
      $region41: #{conv_block1_forward.1} parent=39 // pred_check
        %p1219 = pneg %p144
      $region42: #{conv_block1_forward.1} parent=39 // pred_check_branch
        %1221 = sbr.rel (%p1219) target = $region44
      $region43: #{conv_block1_forward.1} parent=39 // pred_region
        _
      $region44: #{conv_block1_forward.1} parent=39 // pred_fallthru
        _
    $region40: #{conv_block1_forward.1} parent=5 // pred_fallthru
      _
    %p1222 = scmp.le.s32.totalorder 2, %s11
    // Predicated region
    $region45: #{conv_block1_forward.1} parent=5 // pred_check
      %p1223 = pneg %p1222
    $region46: #{conv_block1_forward.1} parent=5 // pred_check_branch
      %1225 = sbr.rel (%p1223) target = $region48
    $region47: #{conv_block1_forward.1} parent=5 // pred_region
      %s1226 = ssub.s32 %s11, 2
      // Predicated region
      $region49: #{conv_block1_forward.1} parent=47 // pred_check
        %p1227 = pneg %p150
      $region50: #{conv_block1_forward.1} parent=47 // pred_check_branch
        %1229 = sbr.rel (%p1227) target = $region52
      $region51: #{conv_block1_forward.1} parent=47 // pred_region
        %p1230 = scmp.lt.s32.totalorder %s17, 1
        %s1231 = scalar_select %p1230, %s17, 1
        %s1232 = smul.addr %s1231, 4
        %s1233 = smul.addr %s1232, 8
        %s1234 = scalar_lea.vmem %s5, %s1233
      $region52: #{conv_block1_forward.1} parent=47 // pred_fallthru
        _
    $region48: #{conv_block1_forward.1} parent=5 // pred_fallthru
      _
  $region6: #{conv_block1_forward.1} parent=0 // loop_footer
    %s15 = sadd.s32 1, %s11
  $region7: #{conv_block1_forward.1} parent=0 // loop_footer_branch
    %10 = sbr.rel target = $region3
  $region8: #{conv_block1_forward.1} parent=0 // loop_exit
    _

</llo_original>
